<compile_context>
chip_gen: v7x
topology: tpu7x:2x2x1
jax: 0.10.0
libtpu: 0.0.40
codegen_flags: <defaults>
</compile_context>

<pallas_src>
import jax
import jax.numpy as jnp
from jax.experimental import pallas as pl
from jax.experimental.pallas import tpu as pltpu

HIDDEN1 = 500
HIDDEN2 = 100
HIDDEN3 = 20

LANE = 128
SUBLANE = 8
MAX_TILE_B = 1024
ACT_VMEM_BUDGET = 24 * 1024 * 1024  # double-buffered activation blocks budget


def _cdiv(a, b):
    return -(-a // b)


def _round_up(n, m):
    return _cdiv(n, m) * m


# Lane-padded hidden widths (already multiples of 128 keep outputs lane-dense).
H1P = _round_up(HIDDEN1, LANE)  # 512
H2P = _round_up(HIDDEN2, LANE)  # 128
H3P = _round_up(HIDDEN3, LANE)  # 128


def mlp_kernel(x_ref,
               w1_ref, b1_ref, w2_ref, b2_ref, w3_ref, b3_ref, w4_ref, b4_ref,
               out_ref, em1_ref, em2_ref, em3_ref, em4_ref, em5_ref, em6_ref):
    """One batch tile: x [TILE_B, IN_P] -> output + all six intermediates."""
    x = x_ref[...]

    # layer 1: IN_P -> 512 (true 500; padded lanes stay exactly zero)
    h1 = jnp.dot(x, w1_ref[...], preferred_element_type=jnp.float32) + b1_ref[...]
    em1_ref[...] = h1
    a1 = jnp.maximum(h1, 0.0)            # ReLU; Dropout(p=0.0) is identity
    em2_ref[...] = a1

    # layer 2: 512 -> 128 (true 100)
    h2 = jnp.dot(a1.astype(w2_ref.dtype), w2_ref[...],
                 preferred_element_type=jnp.float32) + b2_ref[...]
    em3_ref[...] = h2
    a2 = jnp.maximum(h2, 0.0)
    em4_ref[...] = a2

    # layer 3: 128 -> 128 (true 20)
    h3 = jnp.dot(a2.astype(w3_ref.dtype), w3_ref[...],
                 preferred_element_type=jnp.float32) + b3_ref[...]
    em5_ref[...] = h3
    a3 = jnp.maximum(h3, 0.0)
    em6_ref[...] = a3

    # output layer: 128 -> OUT_P (true output_size)
    out_ref[...] = jnp.dot(a3.astype(w4_ref.dtype), w4_ref[...],
                           preferred_element_type=jnp.float32) + b4_ref[...]


def prepare_params(params, use_bf16=False):
    """One-time prep: transpose to [in, out], zero-pad, optionally cast to bf16.

    params: PyTorch-convention weights (out, in) + 1-D biases.
    Biases stay f32 (added after the f32 accumulation).
    """
    w_dtype = jnp.bfloat16 if use_bf16 else jnp.float32
    input_size = params["w1"].shape[1]
    output_size = params["w4"].shape[0]
    # K is exempt from the 128 rule (full-extent block); only round to sublanes
    # when it isn't already aligned, so typical inputs skip lane padding of x.
    in_p = input_size if input_size % SUBLANE == 0 else _round_up(input_size, SUBLANE)
    out_p = _round_up(output_size, LANE)

    def pad_wt(w, in_pad, out_pad):
        wt = w.T.astype(jnp.float32)                       # [in, out]
        wt = jnp.pad(wt, ((0, in_pad - wt.shape[0]), (0, out_pad - wt.shape[1])))
        return wt.astype(w_dtype)

    def pad_b(b, out_pad):
        b = b.astype(jnp.float32).reshape(1, -1)
        return jnp.pad(b, ((0, 0), (0, out_pad - b.shape[1])))

    prepped = {
        "w1": pad_wt(params["w1"], in_p, H1P), "b1": pad_b(params["b1"], H1P),
        "w2": pad_wt(params["w2"], H1P, H2P),  "b2": pad_b(params["b2"], H2P),
        "w3": pad_wt(params["w3"], H2P, H3P),  "b3": pad_b(params["b3"], H3P),
        "w4": pad_wt(params["w4"], H3P, out_p), "b4": pad_b(params["b4"], out_p),
    }
    meta = {"input_size": input_size, "output_size": output_size,
            "in_p": in_p, "out_p": out_p}
    return prepped, meta


def _choose_tiling(B, in_p, out_p):
    """Balanced batch tiles; >=2 grid steps when possible (v7x megacore)."""
    # f32 bytes per row across double-buffered x + 7 output blocks.
    per_row_bytes = 8 * (in_p + out_p + 2 * (H1P + H2P + H3P))
    cap = max(SUBLANE, (ACT_VMEM_BUDGET // per_row_bytes) // SUBLANE * SUBLANE)
    max_tile = min(MAX_TILE_B, cap)

    n_tiles = _cdiv(B, max_tile)
    if n_tiles == 1 and B > SUBLANE:
        n_tiles = 2                    # let the 2 v7x TensorCores both work
    tile_b = _round_up(_cdiv(B, n_tiles), SUBLANE)
    n_tiles = _cdiv(B, tile_b)         # re-derive after sublane rounding
    return tile_b, n_tiles


def mlp_forward(x, prepped, meta, tile_b=None, trim_outputs=True):
    """x: [B, input_size]. Returns (output, em1..em6) matching the PyTorch module.

    trim_outputs=False returns the lane-padded, batch-padded arrays directly
    (avoids the post-kernel slice copies when the consumer can handle padding).
    """
    B = x.shape[0]
    in_size, out_size = meta["input_size"], meta["output_size"]
    in_p, out_p = meta["in_p"], meta["out_p"]
    w_dtype = prepped["w1"].dtype

    if tile_b is None:
        tile_b, n_tiles = _choose_tiling(B, in_p, out_p)
    else:
        tile_b = _round_up(tile_b, SUBLANE)
        n_tiles = _cdiv(B, tile_b)
    b_pad = tile_b * n_tiles

    x_p = x.astype(jnp.float32)
    if b_pad != B or in_p != in_size:
        x_p = jnp.pad(x_p, ((0, b_pad - B), (0, in_p - in_size)))
    x_p = x_p.astype(w_dtype)          # no-op for f32; halves x DMA for bf16

    grid = (n_tiles,)

    # Batch-tiled activations; constant-index (VMEM-resident) weights/biases.
    def act_spec(f):
        return pl.BlockSpec((tile_b, f), lambda i: (i, 0))

    def res_spec(r, c):
        return pl.BlockSpec((r, c), lambda i: (0, 0))

    in_specs = [
        act_spec(in_p),                           # x
        res_spec(in_p, H1P), res_spec(1, H1P),    # w1, b1
        res_spec(H1P, H2P),  res_spec(1, H2P),    # w2, b2
        res_spec(H2P, H3P),  res_spec(1, H3P),    # w3, b3
        res_spec(H3P, out_p), res_spec(1, out_p),  # w4, b4
    ]
    out_widths = (out_p, H1P, H1P, H2P, H2P, H3P, H3P)  # out, em1..em6
    out_specs = tuple(act_spec(f) for f in out_widths)
    out_shapes = tuple(jax.ShapeDtypeStruct((b_pad, f), jnp.float32)
                       for f in out_widths)

    w_bytes = jnp.dtype(w_dtype).itemsize
    flops = 2 * b_pad * (in_p * H1P + H1P * H2P + H2P * H3P + H3P * out_p)
    bytes_accessed = (
        b_pad * in_p * w_bytes                                       # x read
        + (in_p * H1P + H1P * H2P + H2P * H3P + H3P * out_p) * w_bytes  # weights
        + (H1P + H2P + H3P + out_p) * 4                              # biases
        + b_pad * sum(out_widths) * 4                                # outputs
    )

    outs = pl.pallas_call(
        mlp_kernel,
        out_shape=out_shapes,
        grid=grid,
        in_specs=in_specs,
        out_specs=out_specs,
        compiler_params=pltpu.CompilerParams(
            dimension_semantics=("parallel",)),
        cost_estimate=pl.CostEstimate(flops=flops, transcendentals=0,
                                      bytes_accessed=bytes_accessed),
    )(x_p,
      prepped["w1"], prepped["b1"], prepped["w2"], prepped["b2"],
      prepped["w3"], prepped["b3"], prepped["w4"], prepped["b4"])

    if not trim_outputs:
        return outs

    out_arr, em1, em2, em3, em4, em5, em6 = outs
    return (out_arr[:B, :out_size],
            em1[:B, :HIDDEN1], em2[:B, :HIDDEN1],
            em3[:B, :HIDDEN2], em4[:B, :HIDDEN2],
            em5[:B, :HIDDEN3], em6[:B, :HIDDEN3])


def init_params(key, input_size, output_size):
    """Deterministic synthetic parameters, PyTorch nn.Linear shapes (out, in)."""
    ks = jax.random.split(key, 8)

    def linear(kw, kb, fan_in, fan_out):
        bound = 1.0 / jnp.sqrt(fan_in)
        w = jax.random.uniform(kw, (fan_out, fan_in), jnp.float32, -bound, bound)
        b = jax.random.uniform(kb, (fan_out,), jnp.float32, -bound, bound)
        return w, b

    w1, b1 = linear(ks[0], ks[1], input_size, HIDDEN1)
    w2, b2 = linear(ks[2], ks[3], HIDDEN1, HIDDEN2)
    w3, b3 = linear(ks[4], ks[5], HIDDEN2, HIDDEN3)
    w4, b4 = linear(ks[6], ks[7], HIDDEN3, output_size)
    return {"w1": w1, "b1": b1, "w2": w2, "b2": b2,
            "w3": w3, "b3": b3, "w4": w4, "b4": b4}


def mlp_reference(x, p):
    h1 = x @ p["w1"].T + p["b1"]
    a1 = jnp.maximum(h1, 0.0)
    h2 = a1 @ p["w2"].T + p["b2"]
    a2 = jnp.maximum(h2, 0.0)
    h3 = a2 @ p["w3"].T + p["b3"]
    a3 = jnp.maximum(h3, 0.0)
    out = a3 @ p["w4"].T + p["b4"]
    return out, h1, a1, h2, a2, h3, a3


if __name__ == "__main__":
    key = jax.random.PRNGKey(0)
    k_x, k_p = jax.random.split(key)

    batch = 2
    input_size = 64        # e.g. n_letters * length
    output_size = 10

    x = jax.random.normal(k_x, (batch, input_size), jnp.float32)
    params = init_params(k_p, input_size, output_size)
    refs = mlp_reference(x, params)

    # f32 path: exact vs. reference (padded lanes/rows are exactly zero).
    prepped, meta = prepare_params(params, use_bf16=False)
    outs = jax.block_until_ready(mlp_forward(x, prepped, meta))
    for got, want in zip(outs, refs):
        assert got.shape == want.shape, (got.shape, want.shape)
        assert jnp.allclose(got, want, atol=1e-4, rtol=1e-4), "f32 mismatch"

    # bf16-operand path (f32 accumulation): relaxed tolerance for bf16 rounding.
    prepped_bf16, meta_bf16 = prepare_params(params, use_bf16=True)
    outs_bf16 = jax.block_until_ready(mlp_forward(x, prepped_bf16, meta_bf16))
    for got, want in zip(outs_bf16, refs):
        assert got.shape == want.shape, (got.shape, want.shape)
        assert jnp.allclose(got, want, atol=5e-2, rtol=5e-2), "bf16 mismatch"

    print("KERNEL_OK")
</pallas_src>

<mosaic_0001>
module attributes {stable_mosaic.version = 11 : i64} {
  func.func @mlp_kernel(%arg0: i32, %arg1: memref<8x64xf32, #tpu.memory_space<vmem>>, %arg2: memref<64x512xf32, #tpu.memory_space<vmem>>, %arg3: memref<1x512xf32, #tpu.memory_space<vmem>>, %arg4: memref<512x128xf32, #tpu.memory_space<vmem>>, %arg5: memref<1x128xf32, #tpu.memory_space<vmem>>, %arg6: memref<128x128xf32, #tpu.memory_space<vmem>>, %arg7: memref<1x128xf32, #tpu.memory_space<vmem>>, %arg8: memref<128x128xf32, #tpu.memory_space<vmem>>, %arg9: memref<1x128xf32, #tpu.memory_space<vmem>>, %arg10: memref<8x128xf32, #tpu.memory_space<vmem>>, %arg11: memref<8x512xf32, #tpu.memory_space<vmem>>, %arg12: memref<8x512xf32, #tpu.memory_space<vmem>>, %arg13: memref<8x128xf32, #tpu.memory_space<vmem>>, %arg14: memref<8x128xf32, #tpu.memory_space<vmem>>, %arg15: memref<8x128xf32, #tpu.memory_space<vmem>>, %arg16: memref<8x128xf32, #tpu.memory_space<vmem>>) attributes {dimension_semantics = [#tpu.dimension_semantics<parallel>], iteration_bounds = array<i64: 1>, scalar_prefetch = 0 : i64, scratch_operands = 0 : i64, tpu.core_type = #tpu.core_type<tc>, window_params = [{transform_indices = @transform_0, window_bounds = array<i64: 8, 64>}, {pipeline_mode = #tpu.pipeline_mode<synchronous>, transform_indices = @transform_1, window_bounds = array<i64: 64, 512>}, {pipeline_mode = #tpu.pipeline_mode<synchronous>, transform_indices = @transform_2, window_bounds = array<i64: 1, 512>}, {pipeline_mode = #tpu.pipeline_mode<synchronous>, transform_indices = @transform_3, window_bounds = array<i64: 512, 128>}, {pipeline_mode = #tpu.pipeline_mode<synchronous>, transform_indices = @transform_4, window_bounds = array<i64: 1, 128>}, {pipeline_mode = #tpu.pipeline_mode<synchronous>, transform_indices = @transform_5, window_bounds = array<i64: 128, 128>}, {pipeline_mode = #tpu.pipeline_mode<synchronous>, transform_indices = @transform_6, window_bounds = array<i64: 1, 128>}, {pipeline_mode = #tpu.pipeline_mode<synchronous>, transform_indices = @transform_7, window_bounds = array<i64: 128, 128>}, {pipeline_mode = #tpu.pipeline_mode<synchronous>, transform_indices = @transform_8, window_bounds = array<i64: 1, 128>}, {transform_indices = @transform_9, window_bounds = array<i64: 8, 128>}, {transform_indices = @transform_10, window_bounds = array<i64: 8, 512>}, {transform_indices = @transform_11, window_bounds = array<i64: 8, 512>}, {transform_indices = @transform_12, window_bounds = array<i64: 8, 128>}, {transform_indices = @transform_13, window_bounds = array<i64: 8, 128>}, {transform_indices = @transform_14, window_bounds = array<i64: 8, 128>}, {transform_indices = @transform_15, window_bounds = array<i64: 8, 128>}]} {
    %c0 = arith.constant 0 : index
    %c0_0 = arith.constant 0 : index
    %0 = vector.load %arg1[%c0, %c0_0] : memref<8x64xf32, #tpu.memory_space<vmem>>, vector<8x64xf32>
    %c0_1 = arith.constant 0 : index
    %c0_2 = arith.constant 0 : index
    %1 = vector.load %arg2[%c0_1, %c0_2] : memref<64x512xf32, #tpu.memory_space<vmem>>, vector<64x512xf32>
    %cst = arith.constant dense<0.000000e+00> : vector<8x512xf32>
    %2 = tpu.matmul %0, %1, %cst {dimension_numbers = #tpu.dot_dimension_numbers<[1], [0], [0], [1], [0, 0, 1, 1], [], []>} : vector<8x64xf32>, vector<64x512xf32>, vector<8x512xf32> -> vector<8x512xf32>
    %c0_3 = arith.constant 0 : index
    %c0_4 = arith.constant 0 : index
    %3 = vector.load %arg3[%c0_3, %c0_4] : memref<1x512xf32, #tpu.memory_space<vmem>>, vector<1x512xf32>
    %4 = vector.broadcast %3 : vector<1x512xf32> to vector<8x512xf32>
    %5 = arith.addf %2, %4 : vector<8x512xf32>
    %c0_5 = arith.constant 0 : index
    %c0_6 = arith.constant 0 : index
    %6 = vector.load %arg11[%c0_5, %c0_6] : memref<8x512xf32, #tpu.memory_space<vmem>>, vector<8x512xf32>
    tpu.vector_store %arg11[%c0_5, %c0_6], %5 {strides = array<i32>} : memref<8x512xf32, #tpu.memory_space<vmem>>, vector<8x512xf32>,
    %cst_7 = arith.constant 0.000000e+00 : f32
    %7 = vector.broadcast %cst_7 : f32 to vector<8x512xf32>
    %8 = arith.maximumf %5, %7 : vector<8x512xf32>
    %c0_8 = arith.constant 0 : index
    %c0_9 = arith.constant 0 : index
    %9 = vector.load %arg12[%c0_8, %c0_9] : memref<8x512xf32, #tpu.memory_space<vmem>>, vector<8x512xf32>
    tpu.vector_store %arg12[%c0_8, %c0_9], %8 {strides = array<i32>} : memref<8x512xf32, #tpu.memory_space<vmem>>, vector<8x512xf32>,
    %c0_10 = arith.constant 0 : index
    %c0_11 = arith.constant 0 : index
    %10 = vector.load %arg4[%c0_10, %c0_11] : memref<512x128xf32, #tpu.memory_space<vmem>>, vector<512x128xf32>
    %cst_12 = arith.constant dense<0.000000e+00> : vector<8x128xf32>
    %11 = tpu.matmul %8, %10, %cst_12 {dimension_numbers = #tpu.dot_dimension_numbers<[1], [0], [0], [1], [0, 0, 1, 1], [], []>} : vector<8x512xf32>, vector<512x128xf32>, vector<8x128xf32> -> vector<8x128xf32>
    %c0_13 = arith.constant 0 : index
    %c0_14 = arith.constant 0 : index
    %12 = vector.load %arg5[%c0_13, %c0_14] : memref<1x128xf32, #tpu.memory_space<vmem>>, vector<1x128xf32>
    %13 = vector.broadcast %12 : vector<1x128xf32> to vector<8x128xf32>
    %14 = arith.addf %11, %13 : vector<8x128xf32>
    %c0_15 = arith.constant 0 : index
    %c0_16 = arith.constant 0 : index
    %15 = vector.load %arg13[%c0_15, %c0_16] : memref<8x128xf32, #tpu.memory_space<vmem>>, vector<8x128xf32>
    tpu.vector_store %arg13[%c0_15, %c0_16], %14 {strides = array<i32>} : memref<8x128xf32, #tpu.memory_space<vmem>>, vector<8x128xf32>,
    %cst_17 = arith.constant 0.000000e+00 : f32
    %16 = vector.broadcast %cst_17 : f32 to vector<8x128xf32>
    %17 = arith.maximumf %14, %16 : vector<8x128xf32>
    %c0_18 = arith.constant 0 : index
    %c0_19 = arith.constant 0 : index
    %18 = vector.load %arg14[%c0_18, %c0_19] : memref<8x128xf32, #tpu.memory_space<vmem>>, vector<8x128xf32>
    tpu.vector_store %arg14[%c0_18, %c0_19], %17 {strides = array<i32>} : memref<8x128xf32, #tpu.memory_space<vmem>>, vector<8x128xf32>,
    %c0_20 = arith.constant 0 : index
    %c0_21 = arith.constant 0 : index
    %19 = vector.load %arg6[%c0_20, %c0_21] : memref<128x128xf32, #tpu.memory_space<vmem>>, vector<128x128xf32>
    %cst_22 = arith.constant dense<0.000000e+00> : vector<8x128xf32>
    %20 = tpu.matmul %17, %19, %cst_22 {dimension_numbers = #tpu.dot_dimension_numbers<[1], [0], [0], [1], [0, 0, 1, 1], [], []>} : vector<8x128xf32>, vector<128x128xf32>, vector<8x128xf32> -> vector<8x128xf32>
    %c0_23 = arith.constant 0 : index
    %c0_24 = arith.constant 0 : index
    %21 = vector.load %arg7[%c0_23, %c0_24] : memref<1x128xf32, #tpu.memory_space<vmem>>, vector<1x128xf32>
    %22 = vector.broadcast %21 : vector<1x128xf32> to vector<8x128xf32>
    %23 = arith.addf %20, %22 : vector<8x128xf32>
    %c0_25 = arith.constant 0 : index
    %c0_26 = arith.constant 0 : index
    %24 = vector.load %arg15[%c0_25, %c0_26] : memref<8x128xf32, #tpu.memory_space<vmem>>, vector<8x128xf32>
    tpu.vector_store %arg15[%c0_25, %c0_26], %23 {strides = array<i32>} : memref<8x128xf32, #tpu.memory_space<vmem>>, vector<8x128xf32>,
    %cst_27 = arith.constant 0.000000e+00 : f32
    %25 = vector.broadcast %cst_27 : f32 to vector<8x128xf32>
    %26 = arith.maximumf %23, %25 : vector<8x128xf32>
    %c0_28 = arith.constant 0 : index
    %c0_29 = arith.constant 0 : index
    %27 = vector.load %arg16[%c0_28, %c0_29] : memref<8x128xf32, #tpu.memory_space<vmem>>, vector<8x128xf32>
    tpu.vector_store %arg16[%c0_28, %c0_29], %26 {strides = array<i32>} : memref<8x128xf32, #tpu.memory_space<vmem>>, vector<8x128xf32>,
    %c0_30 = arith.constant 0 : index
    %c0_31 = arith.constant 0 : index
    %28 = vector.load %arg8[%c0_30, %c0_31] : memref<128x128xf32, #tpu.memory_space<vmem>>, vector<128x128xf32>
    %cst_32 = arith.constant dense<0.000000e+00> : vector<8x128xf32>
    %29 = tpu.matmul %26, %28, %cst_32 {dimension_numbers = #tpu.dot_dimension_numbers<[1], [0], [0], [1], [0, 0, 1, 1], [], []>} : vector<8x128xf32>, vector<128x128xf32>, vector<8x128xf32> -> vector<8x128xf32>
    %c0_33 = arith.constant 0 : index
    %c0_34 = arith.constant 0 : index
    %30 = vector.load %arg9[%c0_33, %c0_34] : memref<1x128xf32, #tpu.memory_space<vmem>>, vector<1x128xf32>
    %31 = vector.broadcast %30 : vector<1x128xf32> to vector<8x128xf32>
    %32 = arith.addf %29, %31 : vector<8x128xf32>
    %c0_35 = arith.constant 0 : index
    %c0_36 = arith.constant 0 : index
    %33 = vector.load %arg10[%c0_35, %c0_36] : memref<8x128xf32, #tpu.memory_space<vmem>>, vector<8x128xf32>
    tpu.vector_store %arg10[%c0_35, %c0_36], %32 {strides = array<i32>} : memref<8x128xf32, #tpu.memory_space<vmem>>, vector<8x128xf32>,
    return
  }
  func.func @transform_0(%arg0: i32) -> (i32, i32) {
    %c0_i32 = arith.constant 0 : i32
    %c0_i32_0 = arith.constant 0 : i32
    return %arg0, %c0_i32 : i32, i32
  }
  func.func @transform_1(%arg0: i32) -> (i32, i32) {
    %c0_i32 = arith.constant 0 : i32
    %c0_i32_0 = arith.constant 0 : i32
    %c0_i32_1 = arith.constant 0 : i32
    return %c0_i32, %c0_i32_0 : i32, i32
  }
  func.func @transform_2(%arg0: i32) -> (i32, i32) {
    %c0_i32 = arith.constant 0 : i32
    %c0_i32_0 = arith.constant 0 : i32
    %c0_i32_1 = arith.constant 0 : i32
    return %c0_i32, %c0_i32_0 : i32, i32
  }
  func.func @transform_3(%arg0: i32) -> (i32, i32) {
    %c0_i32 = arith.constant 0 : i32
    %c0_i32_0 = arith.constant 0 : i32
    %c0_i32_1 = arith.constant 0 : i32
    return %c0_i32, %c0_i32_0 : i32, i32
  }
  func.func @transform_4(%arg0: i32) -> (i32, i32) {
    %c0_i32 = arith.constant 0 : i32
    %c0_i32_0 = arith.constant 0 : i32
    %c0_i32_1 = arith.constant 0 : i32
    return %c0_i32, %c0_i32_0 : i32, i32
  }
  func.func @transform_5(%arg0: i32) -> (i32, i32) {
    %c0_i32 = arith.constant 0 : i32
    %c0_i32_0 = arith.constant 0 : i32
    %c0_i32_1 = arith.constant 0 : i32
    return %c0_i32, %c0_i32_0 : i32, i32
  }
  func.func @transform_6(%arg0: i32) -> (i32, i32) {
    %c0_i32 = arith.constant 0 : i32
    %c0_i32_0 = arith.constant 0 : i32
    %c0_i32_1 = arith.constant 0 : i32
    return %c0_i32, %c0_i32_0 : i32, i32
  }
  func.func @transform_7(%arg0: i32) -> (i32, i32) {
    %c0_i32 = arith.constant 0 : i32
    %c0_i32_0 = arith.constant 0 : i32
    %c0_i32_1 = arith.constant 0 : i32
    return %c0_i32, %c0_i32_0 : i32, i32
  }
  func.func @transform_8(%arg0: i32) -> (i32, i32) {
    %c0_i32 = arith.constant 0 : i32
    %c0_i32_0 = arith.constant 0 : i32
    %c0_i32_1 = arith.constant 0 : i32
    return %c0_i32, %c0_i32_0 : i32, i32
  }
  func.func @transform_9(%arg0: i32) -> (i32, i32) {
    %c0_i32 = arith.constant 0 : i32
    %c0_i32_0 = arith.constant 0 : i32
    return %arg0, %c0_i32 : i32, i32
  }
  func.func @transform_10(%arg0: i32) -> (i32, i32) {
    %c0_i32 = arith.constant 0 : i32
    %c0_i32_0 = arith.constant 0 : i32
    return %arg0, %c0_i32 : i32, i32
  }
  func.func @transform_11(%arg0: i32) -> (i32, i32) {
    %c0_i32 = arith.constant 0 : i32
    %c0_i32_0 = arith.constant 0 : i32
    return %arg0, %c0_i32 : i32, i32
  }
  func.func @transform_12(%arg0: i32) -> (i32, i32) {
    %c0_i32 = arith.constant 0 : i32
    %c0_i32_0 = arith.constant 0 : i32
    return %arg0, %c0_i32 : i32, i32
  }
  func.func @transform_13(%arg0: i32) -> (i32, i32) {
    %c0_i32 = arith.constant 0 : i32
    %c0_i32_0 = arith.constant 0 : i32
    return %arg0, %c0_i32 : i32, i32
  }
  func.func @transform_14(%arg0: i32) -> (i32, i32) {
    %c0_i32 = arith.constant 0 : i32
    %c0_i32_0 = arith.constant 0 : i32
    return %arg0, %c0_i32 : i32, i32
  }
  func.func @transform_15(%arg0: i32) -> (i32, i32) {
    %c0_i32 = arith.constant 0 : i32
    %c0_i32_0 = arith.constant 0 : i32
    return %arg0, %c0_i32 : i32, i32
  }
}

</mosaic_0001>

<llo_original>
// kernel: tpu_custom_call.1
$region0: #{tpu_custom_call.1}
  #allocation0 [shape = 'u32[]', space=smem, size = 0x4, offset = 0x4, fixed_abs, tag = 'smem constant byte address 0x4 - core index']
  #allocation1 [shape = 'u32[144,128]{1,0:T(1,128)}', space=vmem, size = 0x12000, scoped, tag = 'internal scratch']
  %s0 = inlined_call_operand.hbm [shape: f32[8,64], index: 0, kind: input, shape index: {}]
  %s1 = inlined_call_operand.hbm [shape: f32[64,512], index: 1, kind: input, shape index: {}]
  %s2 = inlined_call_operand.vmem [shape: f32[1,512], index: 2, kind: input, shape index: {}]
  %s3 = inlined_call_operand.hbm [shape: f32[512,128], index: 3, kind: input, shape index: {}]
  %s4 = inlined_call_operand.vmem [shape: f32[1,128], index: 4, kind: input, shape index: {}]
  %s5 = inlined_call_operand.hbm [shape: f32[128,128], index: 5, kind: input, shape index: {}]
  %s6 = inlined_call_operand.vmem [shape: f32[1,128], index: 6, kind: input, shape index: {}]
  %s7 = inlined_call_operand.hbm [shape: f32[128,128], index: 7, kind: input, shape index: {}]
  %s8 = inlined_call_operand.vmem [shape: f32[1,128], index: 8, kind: input, shape index: {}]
  %s9 = inlined_call_operand.hbm [shape: f32[8,128], index: 9, kind: output, shape index: {0}]
  %s10 = inlined_call_operand.hbm [shape: f32[8,512], index: 10, kind: output, shape index: {1}]
  %s11 = inlined_call_operand.hbm [shape: f32[8,512], index: 11, kind: output, shape index: {2}]
  %s12 = inlined_call_operand.hbm [shape: f32[8,128], index: 12, kind: output, shape index: {3}]
  %s13 = inlined_call_operand.hbm [shape: f32[8,128], index: 13, kind: output, shape index: {4}]
  %s14 = inlined_call_operand.hbm [shape: f32[8,128], index: 14, kind: output, shape index: {5}]
  %s15 = inlined_call_operand.hbm [shape: f32[8,128], index: 15, kind: output, shape index: {6}]
  %16 = xla_tuple %s9, %s10, %s11, %s12, %s13, %s14, %s15
  %s17 = sld [smem:[#allocation0]]
  $region114: #{tpu_custom_call.1} parent=0
    _
  %s19 = ssub.s32 1, %s17
  %s20 = scalar_select 0, %s19, %s17
  $region1: #{tpu_custom_call.1} parent=0
    #allocation2 [shape = 'u8[4096]{0}', space=vmem, size = 0x1000, scoped, tag = 'input window, operand 0, single buffered']
    #allocation3 [shape = 's32[1]{0}', space=sflag, size = 0x4, scoped, tag = 'scoped memory for tpu_custom_call.1']
    #allocation4 [shape = 's32[1]{0}', space=sflag, size = 0x4, scoped, tag = 'scoped memory for tpu_custom_call.1']
    #allocation5 [shape = 'u8[131072]{0}', space=vmem, size = 0x20000, scoped, tag = 'input window, operand 1, single buffered']
    #allocation6 [shape = 's32[1]{0}', space=sflag, size = 0x4, scoped, tag = 'scoped memory for tpu_custom_call.1']
    #allocation7 [shape = 'u8[262144]{0}', space=vmem, size = 0x40000, scoped, tag = 'input window, operand 3, single buffered']
    #allocation8 [shape = 'u8[65536]{0}', space=vmem, size = 0x10000, scoped, tag = 'input window, operand 5, single buffered']
    #allocation9 [shape = 's32[1]{0}', space=sflag, size = 0x4, scoped, tag = 'scoped memory for tpu_custom_call.1']
    #allocation10 [shape = 'u8[65536]{0}', space=vmem, size = 0x10000, scoped, tag = 'input window, operand 7, single buffered']
    #allocation11 [shape = 'u8[4096]{0}', space=vmem, size = 0x1000, scoped, tag = 'output window, operand 0, single buffered']
    #allocation12 [shape = 'u8[16384]{0}', space=vmem, size = 0x4000, scoped, tag = 'output window, operand 1, single buffered']
    #allocation13 [shape = 's32[1]{0}', space=sflag, size = 0x4, scoped, tag = 'scoped memory for tpu_custom_call.1']
    #allocation14 [shape = 'u8[16384]{0}', space=vmem, size = 0x4000, scoped, tag = 'output window, operand 2, single buffered']
    #allocation15 [shape = 'u8[4096]{0}', space=vmem, size = 0x1000, scoped, tag = 'output window, operand 3, single buffered']
    #allocation16 [shape = 's32[1]{0}', space=sflag, size = 0x4, scoped, tag = 'scoped memory for tpu_custom_call.1']
    #allocation17 [shape = 'u8[4096]{0}', space=vmem, size = 0x1000, scoped, tag = 'output window, operand 4, single buffered']
    #allocation18 [shape = 'u8[4096]{0}', space=vmem, size = 0x1000, scoped, tag = 'output window, operand 5, single buffered']
    #allocation19 [shape = 's32[1]{0}', space=sflag, size = 0x4, scoped, tag = 'scoped memory for tpu_custom_call.1']
    #allocation20 [shape = 'u8[4096]{0}', space=vmem, size = 0x1000, scoped, tag = 'output window, operand 6, single buffered']
    %21 = vsyncpa [#allocation3], 0
    %22 = vsyncpa [#allocation6], 0
    %23 = vsyncpa [#allocation9], 0
    %24 = vsyncpa [#allocation4], 0
    %25 = vsyncpa [#allocation13], 0
    %26 = vsyncpa [#allocation16], 0
    %27 = vsyncpa [#allocation19], 0
    // Predicated region
    $region2: #{tpu_custom_call.1} parent=1 // pred_check
      _
    $region3: #{tpu_custom_call.1} parent=1 // pred_check_branch
      %29 = sbr.rel (0) target = $region5
    $region4: #{tpu_custom_call.1} parent=1 // pred_region
      %s31 = ssub.s32 128, 128
      %32 = vsyncadd [#allocation3], %s31
      %s34 = sshll.u32 [#allocation2], 4
      %s35 = int_to_ptr.vmem [resolvable:$true] %s34
      %37 = dma.hbm_to_vmem [thread:$0]  %s0, 128, %s35, [#allocation3]
    $region5: #{tpu_custom_call.1} parent=1 // pred_fallthru
      _
    // Predicated region
    $region6: #{tpu_custom_call.1} parent=1 // pred_check
      _
    $region7: #{tpu_custom_call.1} parent=1 // pred_check_branch
      %39 = sbr.rel (0) target = $region9
    $region8: #{tpu_custom_call.1} parent=1 // pred_region
      %s41 = ssub.s32 4096, 4096
      %42 = vsyncadd [#allocation6], %s41
      %s43 = sshll.u32 [#allocation5], 4
      %s44 = int_to_ptr.vmem [resolvable:$true] %s43
      %49 = dma.hbm_to_vmem [thread:$0]  %s1, 4096, %s44, [#allocation6], 512, 512, 32
    $region9: #{tpu_custom_call.1} parent=1 // pred_fallthru
      _
    // Predicated region
    $region10: #{tpu_custom_call.1} parent=1 // pred_check
      _
    $region11: #{tpu_custom_call.1} parent=1 // pred_check_branch
      %51 = sbr.rel (0) target = $region13
    $region12: #{tpu_custom_call.1} parent=1 // pred_region
      _
    $region13: #{tpu_custom_call.1} parent=1 // pred_fallthru
      _
    // Predicated region
    $region14: #{tpu_custom_call.1} parent=1 // pred_check
      _
    $region15: #{tpu_custom_call.1} parent=1 // pred_check_branch
      %53 = sbr.rel (0) target = $region17
    $region16: #{tpu_custom_call.1} parent=1 // pred_region
      %s55 = ssub.s32 8192, 8192
      %56 = vsyncadd [#allocation6], %s55
      %s57 = sshll.u32 [#allocation7], 4
      %s58 = int_to_ptr.vmem [resolvable:$true] %s57
      %63 = dma.hbm_to_vmem [thread:$0]  %s3, 8192, %s58, [#allocation6], 128, 128, 8
    $region17: #{tpu_custom_call.1} parent=1 // pred_fallthru
      _
    // Predicated region
    $region18: #{tpu_custom_call.1} parent=1 // pred_check
      _
    $region19: #{tpu_custom_call.1} parent=1 // pred_check_branch
      %65 = sbr.rel (0) target = $region21
    $region20: #{tpu_custom_call.1} parent=1 // pred_region
      _
    $region21: #{tpu_custom_call.1} parent=1 // pred_fallthru
      _
    // Predicated region
    $region22: #{tpu_custom_call.1} parent=1 // pred_check
      _
    $region23: #{tpu_custom_call.1} parent=1 // pred_check_branch
      %67 = sbr.rel (0) target = $region25
    $region24: #{tpu_custom_call.1} parent=1 // pred_region
      %s69 = ssub.s32 2048, 2048
      %70 = vsyncadd [#allocation9], %s69
      %s71 = sshll.u32 [#allocation8], 4
      %s72 = int_to_ptr.vmem [resolvable:$true] %s71
      %77 = dma.hbm_to_vmem [thread:$0]  %s5, 2048, %s72, [#allocation9], 128, 128, 8
    $region25: #{tpu_custom_call.1} parent=1 // pred_fallthru
      _
    // Predicated region
    $region26: #{tpu_custom_call.1} parent=1 // pred_check
      _
    $region27: #{tpu_custom_call.1} parent=1 // pred_check_branch
      %79 = sbr.rel (0) target = $region29
    $region28: #{tpu_custom_call.1} parent=1 // pred_region
      _
    $region29: #{tpu_custom_call.1} parent=1 // pred_fallthru
      _
    // Predicated region
    $region30: #{tpu_custom_call.1} parent=1 // pred_check
      _
    $region31: #{tpu_custom_call.1} parent=1 // pred_check_branch
      %81 = sbr.rel (0) target = $region33
    $region32: #{tpu_custom_call.1} parent=1 // pred_region
      %s83 = ssub.s32 2048, 2048
      %84 = vsyncadd [#allocation9], %s83
      %s85 = sshll.u32 [#allocation10], 4
      %s86 = int_to_ptr.vmem [resolvable:$true] %s85
      %91 = dma.hbm_to_vmem [thread:$0]  %s7, 2048, %s86, [#allocation9], 128, 128, 8
    $region33: #{tpu_custom_call.1} parent=1 // pred_fallthru
      _
    // Predicated region
    $region34: #{tpu_custom_call.1} parent=1 // pred_check
      _
    $region35: #{tpu_custom_call.1} parent=1 // pred_check_branch
      %93 = sbr.rel (0) target = $region37
    $region36: #{tpu_custom_call.1} parent=1 // pred_region
      _
    $region37: #{tpu_custom_call.1} parent=1 // pred_fallthru
      _
    // Predicated region
    $region38: #{tpu_custom_call.1} parent=1 // pred_check
      _
    $region39: #{tpu_custom_call.1} parent=1 // pred_check_branch
      %95 = sbr.rel (0) target = $region41
    $region40: #{tpu_custom_call.1} parent=1 // pred_region
      %96 = dma.done [#allocation3], 128
    $region41: #{tpu_custom_call.1} parent=1 // pred_fallthru
      _
    // Predicated region
    $region42: #{tpu_custom_call.1} parent=1 // pred_check
      _
    $region43: #{tpu_custom_call.1} parent=1 // pred_check_branch
      %98 = sbr.rel (0) target = $region45
    $region44: #{tpu_custom_call.1} parent=1 // pred_region
      %99 = dma.done [#allocation6], 4096
    $region45: #{tpu_custom_call.1} parent=1 // pred_fallthru
      _
    // Predicated region
    $region46: #{tpu_custom_call.1} parent=1 // pred_check
      _
    $region47: #{tpu_custom_call.1} parent=1 // pred_check_branch
      %101 = sbr.rel (0) target = $region49
    $region48: #{tpu_custom_call.1} parent=1 // pred_region
      %102 = dma.done [#allocation6], 8192
    $region49: #{tpu_custom_call.1} parent=1 // pred_fallthru
      _
    // Predicated region
    $region50: #{tpu_custom_call.1} parent=1 // pred_check
      _
    $region51: #{tpu_custom_call.1} parent=1 // pred_check_branch
      %104 = sbr.rel (0) target = $region53
    $region52: #{tpu_custom_call.1} parent=1 // pred_region
      %105 = dma.done [#allocation9], 2048
    $region53: #{tpu_custom_call.1} parent=1 // pred_fallthru
      _
    // Predicated region
    $region54: #{tpu_custom_call.1} parent=1 // pred_check
      _
    $region55: #{tpu_custom_call.1} parent=1 // pred_check_branch
      %107 = sbr.rel (0) target = $region57
    $region56: #{tpu_custom_call.1} parent=1 // pred_region
      %108 = dma.done [#allocation9], 2048
    $region57: #{tpu_custom_call.1} parent=1 // pred_fallthru
      _
    %v109 = vld [vmem:[#allocation2] sm:$0xff]
    %v110 = vld [vmem:[#allocation5] sm:$0xff]
    %v111 = vld [vmem:[#allocation5 + $0x8] sm:$0xff]
    %v112 = vld [vmem:[#allocation5 + $0x10] sm:$0xff]
    %v113 = vld [vmem:[#allocation5 + $0x18] sm:$0xff]
    %v114 = vld [vmem:[#allocation5 + $0x20] sm:$0xff]
    %v115 = vld [vmem:[#allocation5 + $0x28] sm:$0xff]
    %v116 = vld [vmem:[#allocation5 + $0x30] sm:$0xff]
    %v117 = vld [vmem:[#allocation5 + $0x38] sm:$0xff]
    %v118 = vld [vmem:[#allocation5 + $0x40] sm:$0xff]
    %v119 = vld [vmem:[#allocation5 + $0x48] sm:$0xff]
    %v120 = vld [vmem:[#allocation5 + $0x50] sm:$0xff]
    %v121 = vld [vmem:[#allocation5 + $0x58] sm:$0xff]
    %v122 = vld [vmem:[#allocation5 + $0x60] sm:$0xff]
    %v123 = vld [vmem:[#allocation5 + $0x68] sm:$0xff]
    %v124 = vld [vmem:[#allocation5 + $0x70] sm:$0xff]
    %v125 = vld [vmem:[#allocation5 + $0x78] sm:$0xff]
    %v126 = vld [vmem:[#allocation5 + $0x80] sm:$0xff]
    %v127 = vld [vmem:[#allocation5 + $0x88] sm:$0xff]
    %v128 = vld [vmem:[#allocation5 + $0x90] sm:$0xff]
    %v129 = vld [vmem:[#allocation5 + $0x98] sm:$0xff]
    %v130 = vld [vmem:[#allocation5 + $0xa0] sm:$0xff]
    %v131 = vld [vmem:[#allocation5 + $0xa8] sm:$0xff]
    %v132 = vld [vmem:[#allocation5 + $0xb0] sm:$0xff]
    %v133 = vld [vmem:[#allocation5 + $0xb8] sm:$0xff]
    %v134 = vld [vmem:[#allocation5 + $0xc0] sm:$0xff]
    %v135 = vld [vmem:[#allocation5 + $0xc8] sm:$0xff]
    %v136 = vld [vmem:[#allocation5 + $0xd0] sm:$0xff]
    %v137 = vld [vmem:[#allocation5 + $0xd8] sm:$0xff]
    %v138 = vld [vmem:[#allocation5 + $0xe0] sm:$0xff]
    %v139 = vld [vmem:[#allocation5 + $0xe8] sm:$0xff]
    %v140 = vld [vmem:[#allocation5 + $0xf0] sm:$0xff]
    %v141 = vld [vmem:[#allocation5 + $0xf8] sm:$0xff]
    %v142 = vld [vmem:[%s2] sm:$0xf]
    %v144 = vlaneseq
    %v145 = vshrl.u32 %v144, 7
    %v146 = vsub.s32 0, %v145
    %v147 = vrot.slane %v142, %v146
    %v148 = vlaneseq
    %v149 = vshrl.u32 %v148, 7
    %v150 = vsub.s32 1, %v149
    %v151 = vrot.slane %v142, %v150
    %v152 = vlaneseq
    %v153 = vshrl.u32 %v152, 7
    %v154 = vsub.s32 2, %v153
    %v155 = vrot.slane %v142, %v154
    %v156 = vlaneseq
    %v157 = vshrl.u32 %v156, 7
    %v158 = vsub.s32 3, %v157
    %v159 = vrot.slane %v142, %v158
    %vm164 = vcmask 523264
    %v166 = vsel %vm164, %v109, 0
    %168 = vmatprep.subr.mxu0 %v111
    %169 = vmatpush1.msra.mxu0 %v110
    %170 = vmatprep.subr.mxu0 %v115
    %171 = vmatpush1.msra.mxu0 %v114
    %172 = vmatprep.subr.mxu0 %v119
    %173 = vmatpush1.msra.mxu0 %v118
    %174 = vmatprep.subr.mxu0 %v123
    %175 = vmatpush1.msra.mxu0 %v122
    %176 = vmatprep.subr.mxu0 %v127
    %177 = vmatpush1.msra.mxu0 %v126
    %178 = vmatprep.subr.mxu0 %v131
    %179 = vmatpush1.msra.mxu0 %v130
    %180 = vmatprep.subr.mxu0 %v135
    %181 = vmatpush1.msra.mxu0 %v134
    %182 = vmatprep.subr.mxu0 %v139
    %183 = vmatpush1.msra.mxu0 %v138
    %184 = vmatprep.subr.mxu0 0.0
    %185 = vmatpush1.msra.mxu0 0.0
    %186 = vmatprep.subr.mxu0 0.0
    %187 = vmatpush1.msra.mxu0 0.0
    %188 = vmatprep.subr.mxu0 0.0
    %189 = vmatpush1.msra.mxu0 0.0
    %190 = vmatprep.subr.mxu0 0.0
    %191 = vmatpush1.msra.mxu0 0.0
    %192 = vmatprep.subr.mxu0 0.0
    %193 = vmatpush1.msra.mxu0 0.0
    %194 = vmatprep.subr.mxu0 0.0
    %195 = vmatpush1.msra.mxu0 0.0
    %196 = vmatprep.subr.mxu0 0.0
    %197 = vmatpush1.msra.mxu0 0.0
    %198 = vmatprep.subr.mxu0 0.0
    %199 = vmatpush1.msra.mxu0 0.0
    %200 = vmatprep.subr.mxu0 0.0
    %201 = vmatpush1.msra.mxu0 0.0
    %202 = vmatprep.subr.mxu0 0.0
    %203 = vmatpush1.msra.mxu0 0.0
    %204 = vmatprep.subr.mxu0 0.0
    %205 = vmatpush1.msra.mxu0 0.0
    %206 = vmatprep.subr.mxu0 0.0
    %207 = vmatpush1.msra.mxu0 0.0
    %208 = vmatprep.subr.mxu0 0.0
    %209 = vmatpush1.msra.mxu0 0.0
    %210 = vmatprep.subr.mxu0 0.0
    %211 = vmatpush1.msra.mxu0 0.0
    %212 = vmatprep.subr.mxu0 0.0
    %213 = vmatpush1.msra.mxu0 0.0
    %214 = vmatprep.subr.mxu0 0.0
    %215 = vmatpush1.msra.mxu0 0.0
    %216 = vmatprep.subr.mxu0 0.0
    %217 = vmatpush1.msra.mxu0 0.0
    %218 = vmatprep.subr.mxu0 0.0
    %219 = vmatpush1.msra.mxu0 0.0
    %220 = vmatprep.subr.mxu0 0.0
    %221 = vmatpush1.msra.mxu0 0.0
    %222 = vmatprep.subr.mxu0 0.0
    %223 = vmatpush1.msra.mxu0 0.0
    %224 = vmatprep.subr.mxu0 0.0
    %225 = vmatpush1.msra.mxu0 0.0
    %226 = vmatprep.subr.mxu0 0.0
    %227 = vmatpush1.msra.mxu0 0.0
    %228 = vmatprep.subr.mxu0 0.0
    %229 = vmatpush1.msra.mxu0 0.0
    %230 = vmatprep.subr.mxu0 0.0
    %231 = vmatpush1.msra.mxu0 0.0
    %232 = vmatprep.mubr.f32.mxu0 0.0
    %233 = vmatmul.mubr.f32.gmra.mrb[0].mxu0 %v166
    %v234 = vpop.f32.mrb[0].mxu0
    %v235 = vadd.f32 %v147, %v234
    %v236 = vpop.f32.mrb[0].mxu0
    %v237 = vadd.f32 %v151, %v236
    %238 = vdwg.mxu0
    %239 = vmatprep.subr.mxu0 %v113
    %240 = vmatpush1.msra.mxu0 %v112
    %241 = vmatprep.subr.mxu0 %v117
    %242 = vmatpush1.msra.mxu0 %v116
    %243 = vmatprep.subr.mxu0 %v121
    %244 = vmatpush1.msra.mxu0 %v120
    %245 = vmatprep.subr.mxu0 %v125
    %246 = vmatpush1.msra.mxu0 %v124
    %247 = vmatprep.subr.mxu0 %v129
    %248 = vmatpush1.msra.mxu0 %v128
    %249 = vmatprep.subr.mxu0 %v133
    %250 = vmatpush1.msra.mxu0 %v132
    %251 = vmatprep.subr.mxu0 %v137
    %252 = vmatpush1.msra.mxu0 %v136
    %253 = vmatprep.subr.mxu0 %v141
    %254 = vmatpush1.msra.mxu0 %v140
    %255 = vmatprep.subr.mxu0 0.0
    %256 = vmatpush1.msra.mxu0 0.0
    %257 = vmatprep.subr.mxu0 0.0
    %258 = vmatpush1.msra.mxu0 0.0
    %259 = vmatprep.subr.mxu0 0.0
    %260 = vmatpush1.msra.mxu0 0.0
    %261 = vmatprep.subr.mxu0 0.0
    %262 = vmatpush1.msra.mxu0 0.0
    %263 = vmatprep.subr.mxu0 0.0
    %264 = vmatpush1.msra.mxu0 0.0
    %265 = vmatprep.subr.mxu0 0.0
    %266 = vmatpush1.msra.mxu0 0.0
    %267 = vmatprep.subr.mxu0 0.0
    %268 = vmatpush1.msra.mxu0 0.0
    %269 = vmatprep.subr.mxu0 0.0
    %270 = vmatpush1.msra.mxu0 0.0
    %271 = vmatprep.subr.mxu0 0.0
    %272 = vmatpush1.msra.mxu0 0.0
    %273 = vmatprep.subr.mxu0 0.0
    %274 = vmatpush1.msra.mxu0 0.0
    %275 = vmatprep.subr.mxu0 0.0
    %276 = vmatpush1.msra.mxu0 0.0
    %277 = vmatprep.subr.mxu0 0.0
    %278 = vmatpush1.msra.mxu0 0.0
    %279 = vmatprep.subr.mxu0 0.0
    %280 = vmatpush1.msra.mxu0 0.0
    %281 = vmatprep.subr.mxu0 0.0
    %282 = vmatpush1.msra.mxu0 0.0
    %283 = vmatprep.subr.mxu0 0.0
    %284 = vmatpush1.msra.mxu0 0.0
    %285 = vmatprep.subr.mxu0 0.0
    %286 = vmatpush1.msra.mxu0 0.0
    %287 = vmatprep.subr.mxu0 0.0
    %288 = vmatpush1.msra.mxu0 0.0
    %289 = vmatprep.subr.mxu0 0.0
    %290 = vmatpush1.msra.mxu0 0.0
    %291 = vmatprep.subr.mxu0 0.0
    %292 = vmatpush1.msra.mxu0 0.0
    %293 = vmatprep.subr.mxu0 0.0
    %294 = vmatpush1.msra.mxu0 0.0
    %295 = vmatprep.subr.mxu0 0.0
    %296 = vmatpush1.msra.mxu0 0.0
    %297 = vmatprep.subr.mxu0 0.0
    %298 = vmatpush1.msra.mxu0 0.0
    %299 = vmatprep.subr.mxu0 0.0
    %300 = vmatpush1.msra.mxu0 0.0
    %301 = vmatprep.subr.mxu0 0.0
    %302 = vmatpush1.msra.mxu0 0.0
    %303 = vmatprep.mubr.f32.mxu0 0.0
    %304 = vmatmul.mubr.f32.gmra.mrb[0].mxu0 %v166
    %v305 = vpop.f32.mrb[0].mxu0
    %v306 = vadd.f32 %v155, %v305
    %v307 = vpop.f32.mrb[0].mxu0
    %v308 = vadd.f32 %v159, %v307
    %309 = vdwg.mxu0
    %310 = vst [vmem:[#allocation12] sm:$0xff] %v235
    %311 = vst [vmem:[#allocation12 + $0x8] sm:$0xff] %v237
    %312 = vst [vmem:[#allocation12 + $0x10] sm:$0xff] %v306
    %313 = vst [vmem:[#allocation12 + $0x18] sm:$0xff] %v308
    %v314 = vmax.f32 %v235, 0.0
    %v315 = vmax.f32 %v237, 0.0
    %v316 = vmax.f32 %v306, 0.0
    %v317 = vmax.f32 %v308, 0.0
    %318 = vst [vmem:[#allocation14] sm:$0xff] %v314
    %319 = vst [vmem:[#allocation14 + $0x8] sm:$0xff] %v315
    %320 = vst [vmem:[#allocation14 + $0x10] sm:$0xff] %v316
    %321 = vst [vmem:[#allocation14 + $0x18] sm:$0xff] %v317
    %v322 = vld [vmem:[#allocation7] sm:$0xff]
    %v323 = vld [vmem:[#allocation7 + $0x8] sm:$0xff]
    %v324 = vld [vmem:[#allocation7 + $0x10] sm:$0xff]
    %v325 = vld [vmem:[#allocation7 + $0x18] sm:$0xff]
    %v326 = vld [vmem:[#allocation7 + $0x20] sm:$0xff]
    %v327 = vld [vmem:[#allocation7 + $0x28] sm:$0xff]
    %v328 = vld [vmem:[#allocation7 + $0x30] sm:$0xff]
    %v329 = vld [vmem:[#allocation7 + $0x38] sm:$0xff]
    %v330 = vld [vmem:[#allocation7 + $0x40] sm:$0xff]
    %v331 = vld [vmem:[#allocation7 + $0x48] sm:$0xff]
    %v332 = vld [vmem:[#allocation7 + $0x50] sm:$0xff]
    %v333 = vld [vmem:[#allocation7 + $0x58] sm:$0xff]
    %v334 = vld [vmem:[#allocation7 + $0x60] sm:$0xff]
    %v335 = vld [vmem:[#allocation7 + $0x68] sm:$0xff]
    %v336 = vld [vmem:[#allocation7 + $0x70] sm:$0xff]
    %v337 = vld [vmem:[#allocation7 + $0x78] sm:$0xff]
    %v338 = vld [vmem:[#allocation7 + $0x80] sm:$0xff]
    %v339 = vld [vmem:[#allocation7 + $0x88] sm:$0xff]
    %v340 = vld [vmem:[#allocation7 + $0x90] sm:$0xff]
    %v341 = vld [vmem:[#allocation7 + $0x98] sm:$0xff]
    %v342 = vld [vmem:[#allocation7 + $0xa0] sm:$0xff]
    %v343 = vld [vmem:[#allocation7 + $0xa8] sm:$0xff]
    %v344 = vld [vmem:[#allocation7 + $0xb0] sm:$0xff]
    %v345 = vld [vmem:[#allocation7 + $0xb8] sm:$0xff]
    %v346 = vld [vmem:[#allocation7 + $0xc0] sm:$0xff]
    %v347 = vld [vmem:[#allocation7 + $0xc8] sm:$0xff]
    %v348 = vld [vmem:[#allocation7 + $0xd0] sm:$0xff]
    %v349 = vld [vmem:[#allocation7 + $0xd8] sm:$0xff]
    %v350 = vld [vmem:[#allocation7 + $0xe0] sm:$0xff]
    %v351 = vld [vmem:[#allocation7 + $0xe8] sm:$0xff]
    %v352 = vld [vmem:[#allocation7 + $0xf0] sm:$0xff]
    %v353 = vld [vmem:[#allocation7 + $0xf8] sm:$0xff]
    %v354 = vld [vmem:[#allocation7 + $0x100] sm:$0xff]
    %v355 = vld [vmem:[#allocation7 + $0x108] sm:$0xff]
    %v356 = vld [vmem:[#allocation7 + $0x110] sm:$0xff]
    %v357 = vld [vmem:[#allocation7 + $0x118] sm:$0xff]
    %v358 = vld [vmem:[#allocation7 + $0x120] sm:$0xff]
    %v359 = vld [vmem:[#allocation7 + $0x128] sm:$0xff]
    %v360 = vld [vmem:[#allocation7 + $0x130] sm:$0xff]
    %v361 = vld [vmem:[#allocation7 + $0x138] sm:$0xff]
    %v362 = vld [vmem:[#allocation7 + $0x140] sm:$0xff]
    %v363 = vld [vmem:[#allocation7 + $0x148] sm:$0xff]
    %v364 = vld [vmem:[#allocation7 + $0x150] sm:$0xff]
    %v365 = vld [vmem:[#allocation7 + $0x158] sm:$0xff]
    %v366 = vld [vmem:[#allocation7 + $0x160] sm:$0xff]
    %v367 = vld [vmem:[#allocation7 + $0x168] sm:$0xff]
    %v368 = vld [vmem:[#allocation7 + $0x170] sm:$0xff]
    %v369 = vld [vmem:[#allocation7 + $0x178] sm:$0xff]
    %v370 = vld [vmem:[#allocation7 + $0x180] sm:$0xff]
    %v371 = vld [vmem:[#allocation7 + $0x188] sm:$0xff]
    %v372 = vld [vmem:[#allocation7 + $0x190] sm:$0xff]
    %v373 = vld [vmem:[#allocation7 + $0x198] sm:$0xff]
    %v374 = vld [vmem:[#allocation7 + $0x1a0] sm:$0xff]
    %v375 = vld [vmem:[#allocation7 + $0x1a8] sm:$0xff]
    %v376 = vld [vmem:[#allocation7 + $0x1b0] sm:$0xff]
    %v377 = vld [vmem:[#allocation7 + $0x1b8] sm:$0xff]
    %v378 = vld [vmem:[#allocation7 + $0x1c0] sm:$0xff]
    %v379 = vld [vmem:[#allocation7 + $0x1c8] sm:$0xff]
    %v380 = vld [vmem:[#allocation7 + $0x1d0] sm:$0xff]
    %v381 = vld [vmem:[#allocation7 + $0x1d8] sm:$0xff]
    %v382 = vld [vmem:[#allocation7 + $0x1e0] sm:$0xff]
    %v383 = vld [vmem:[#allocation7 + $0x1e8] sm:$0xff]
    %v384 = vld [vmem:[#allocation7 + $0x1f0] sm:$0xff]
    %v385 = vld [vmem:[#allocation7 + $0x1f8] sm:$0xff]
    %v386 = vld [vmem:[%s4] sm:$0x1]
    %v388 = vlaneseq
    %v389 = vshrl.u32 %v388, 7
    %v390 = vsub.s32 0, %v389
    %v391 = vrot.slane %v386, %v390
    %393 = vmatprep.subr.mxu0 0.0
    %394 = vmatpush1.msra.mxu0 %v322
    %395 = vmatprep.subr.mxu0 0.0
    %396 = vmatpush1.msra.mxu0 %v323
    %397 = vmatprep.subr.mxu0 0.0
    %398 = vmatpush1.msra.mxu0 %v324
    %399 = vmatprep.subr.mxu0 0.0
    %400 = vmatpush1.msra.mxu0 %v325
    %401 = vmatprep.subr.mxu0 0.0
    %402 = vmatpush1.msra.mxu0 %v326
    %403 = vmatprep.subr.mxu0 0.0
    %404 = vmatpush1.msra.mxu0 %v327
    %405 = vmatprep.subr.mxu0 0.0
    %406 = vmatpush1.msra.mxu0 %v328
    %407 = vmatprep.subr.mxu0 0.0
    %408 = vmatpush1.msra.mxu0 %v329
    %409 = vmatprep.subr.mxu0 0.0
    %410 = vmatpush1.msra.mxu0 %v330
    %411 = vmatprep.subr.mxu0 0.0
    %412 = vmatpush1.msra.mxu0 %v331
    %413 = vmatprep.subr.mxu0 0.0
    %414 = vmatpush1.msra.mxu0 %v332
    %415 = vmatprep.subr.mxu0 0.0
    %416 = vmatpush1.msra.mxu0 %v333
    %417 = vmatprep.subr.mxu0 0.0
    %418 = vmatpush1.msra.mxu0 %v334
    %419 = vmatprep.subr.mxu0 0.0
    %420 = vmatpush1.msra.mxu0 %v335
    %421 = vmatprep.subr.mxu0 0.0
    %422 = vmatpush1.msra.mxu0 %v336
    %423 = vmatprep.subr.mxu0 0.0
    %424 = vmatpush1.msra.mxu0 %v337
    %425 = vmatprep.subr.mxu0 0.0
    %426 = vmatpush1.msra.mxu0 %v338
    %427 = vmatprep.subr.mxu0 0.0
    %428 = vmatpush1.msra.mxu0 %v339
    %429 = vmatprep.subr.mxu0 0.0
    %430 = vmatpush1.msra.mxu0 %v340
    %431 = vmatprep.subr.mxu0 0.0
    %432 = vmatpush1.msra.mxu0 %v341
    %433 = vmatprep.subr.mxu0 0.0
    %434 = vmatpush1.msra.mxu0 %v342
    %435 = vmatprep.subr.mxu0 0.0
    %436 = vmatpush1.msra.mxu0 %v343
    %437 = vmatprep.subr.mxu0 0.0
    %438 = vmatpush1.msra.mxu0 %v344
    %439 = vmatprep.subr.mxu0 0.0
    %440 = vmatpush1.msra.mxu0 %v345
    %441 = vmatprep.subr.mxu0 0.0
    %442 = vmatpush1.msra.mxu0 %v346
    %443 = vmatprep.subr.mxu0 0.0
    %444 = vmatpush1.msra.mxu0 %v347
    %445 = vmatprep.subr.mxu0 0.0
    %446 = vmatpush1.msra.mxu0 %v348
    %447 = vmatprep.subr.mxu0 0.0
    %448 = vmatpush1.msra.mxu0 %v349
    %449 = vmatprep.subr.mxu0 0.0
    %450 = vmatpush1.msra.mxu0 %v350
    %451 = vmatprep.subr.mxu0 0.0
    %452 = vmatpush1.msra.mxu0 %v351
    %453 = vmatprep.subr.mxu0 0.0
    %454 = vmatpush1.msra.mxu0 %v352
    %455 = vmatprep.subr.mxu0 0.0
    %456 = vmatpush1.msra.mxu0 %v353
    %457 = vmatprep.mubr.f32.mxu0 %v315
    %458 = vmatmul.mubr.f32.gmra.mrb[0].mxu0 %v314
    %v459 = vpop.f32.mrb[0].mxu0
    %v460 = vadd.f32 %v391, %v459
    %v461 = vpop.f32.mrb[0].mxu0
    %462 = vdwg.mxu0
    %463 = vmatprep.subr.mxu0 0.0
    %464 = vmatpush1.msra.mxu0 %v354
    %465 = vmatprep.subr.mxu0 0.0
    %466 = vmatpush1.msra.mxu0 %v355
    %467 = vmatprep.subr.mxu0 0.0
    %468 = vmatpush1.msra.mxu0 %v356
    %469 = vmatprep.subr.mxu0 0.0
    %470 = vmatpush1.msra.mxu0 %v357
    %471 = vmatprep.subr.mxu0 0.0
    %472 = vmatpush1.msra.mxu0 %v358
    %473 = vmatprep.subr.mxu0 0.0
    %474 = vmatpush1.msra.mxu0 %v359
    %475 = vmatprep.subr.mxu0 0.0
    %476 = vmatpush1.msra.mxu0 %v360
    %477 = vmatprep.subr.mxu0 0.0
    %478 = vmatpush1.msra.mxu0 %v361
    %479 = vmatprep.subr.mxu0 0.0
    %480 = vmatpush1.msra.mxu0 %v362
    %481 = vmatprep.subr.mxu0 0.0
    %482 = vmatpush1.msra.mxu0 %v363
    %483 = vmatprep.subr.mxu0 0.0
    %484 = vmatpush1.msra.mxu0 %v364
    %485 = vmatprep.subr.mxu0 0.0
    %486 = vmatpush1.msra.mxu0 %v365
    %487 = vmatprep.subr.mxu0 0.0
    %488 = vmatpush1.msra.mxu0 %v366
    %489 = vmatprep.subr.mxu0 0.0
    %490 = vmatpush1.msra.mxu0 %v367
    %491 = vmatprep.subr.mxu0 0.0
    %492 = vmatpush1.msra.mxu0 %v368
    %493 = vmatprep.subr.mxu0 0.0
    %494 = vmatpush1.msra.mxu0 %v369
    %495 = vmatprep.subr.mxu0 0.0
    %496 = vmatpush1.msra.mxu0 %v370
    %497 = vmatprep.subr.mxu0 0.0
    %498 = vmatpush1.msra.mxu0 %v371
    %499 = vmatprep.subr.mxu0 0.0
    %500 = vmatpush1.msra.mxu0 %v372
    %501 = vmatprep.subr.mxu0 0.0
    %502 = vmatpush1.msra.mxu0 %v373
    %503 = vmatprep.subr.mxu0 0.0
    %504 = vmatpush1.msra.mxu0 %v374
    %505 = vmatprep.subr.mxu0 0.0
    %506 = vmatpush1.msra.mxu0 %v375
    %507 = vmatprep.subr.mxu0 0.0
    %508 = vmatpush1.msra.mxu0 %v376
    %509 = vmatprep.subr.mxu0 0.0
    %510 = vmatpush1.msra.mxu0 %v377
    %511 = vmatprep.subr.mxu0 0.0
    %512 = vmatpush1.msra.mxu0 %v378
    %513 = vmatprep.subr.mxu0 0.0
    %514 = vmatpush1.msra.mxu0 %v379
    %515 = vmatprep.subr.mxu0 0.0
    %516 = vmatpush1.msra.mxu0 %v380
    %517 = vmatprep.subr.mxu0 0.0
    %518 = vmatpush1.msra.mxu0 %v381
    %519 = vmatprep.subr.mxu0 0.0
    %520 = vmatpush1.msra.mxu0 %v382
    %521 = vmatprep.subr.mxu0 0.0
    %522 = vmatpush1.msra.mxu0 %v383
    %523 = vmatprep.subr.mxu0 0.0
    %524 = vmatpush1.msra.mxu0 %v384
    %525 = vmatprep.subr.mxu0 0.0
    %526 = vmatpush1.msra.mxu0 %v385
    %527 = vmatprep.mubr.f32.mxu0 %v317
    %528 = vmatmul.mubr.f32.gmra.mrb[0].mxu0 %v316
    %v529 = vpop.f32.mrb[0].mxu0
    %v530 = vadd.f32 %v460, %v529
    %v531 = vpop.f32.mrb[0].mxu0
    %532 = vdwg.mxu0
    %533 = vst [vmem:[#allocation15] sm:$0xff] %v530
    %v534 = vmax.f32 %v530, 0.0
    %535 = vst [vmem:[#allocation17] sm:$0xff] %v534
    %v536 = vld [vmem:[#allocation8] sm:$0xff]
    %v537 = vld [vmem:[#allocation8 + $0x8] sm:$0xff]
    %v538 = vld [vmem:[#allocation8 + $0x10] sm:$0xff]
    %v539 = vld [vmem:[#allocation8 + $0x18] sm:$0xff]
    %v540 = vld [vmem:[#allocation8 + $0x20] sm:$0xff]
    %v541 = vld [vmem:[#allocation8 + $0x28] sm:$0xff]
    %v542 = vld [vmem:[#allocation8 + $0x30] sm:$0xff]
    %v543 = vld [vmem:[#allocation8 + $0x38] sm:$0xff]
    %v544 = vld [vmem:[#allocation8 + $0x40] sm:$0xff]
    %v545 = vld [vmem:[#allocation8 + $0x48] sm:$0xff]
    %v546 = vld [vmem:[#allocation8 + $0x50] sm:$0xff]
    %v547 = vld [vmem:[#allocation8 + $0x58] sm:$0xff]
    %v548 = vld [vmem:[#allocation8 + $0x60] sm:$0xff]
    %v549 = vld [vmem:[#allocation8 + $0x68] sm:$0xff]
    %v550 = vld [vmem:[#allocation8 + $0x70] sm:$0xff]
    %v551 = vld [vmem:[#allocation8 + $0x78] sm:$0xff]
    %v552 = vld [vmem:[%s6] sm:$0x1]
    %v554 = vlaneseq
    %v555 = vshrl.u32 %v554, 7
    %v556 = vsub.s32 0, %v555
    %v557 = vrot.slane %v552, %v556
    %559 = vmatprep.subr.mxu0 0.0
    %560 = vmatpush1.msra.mxu0 %v536
    %561 = vmatprep.subr.mxu0 0.0
    %562 = vmatpush1.msra.mxu0 %v537
    %563 = vmatprep.subr.mxu0 0.0
    %564 = vmatpush1.msra.mxu0 %v538
    %565 = vmatprep.subr.mxu0 0.0
    %566 = vmatpush1.msra.mxu0 %v539
    %567 = vmatprep.subr.mxu0 0.0
    %568 = vmatpush1.msra.mxu0 %v540
    %569 = vmatprep.subr.mxu0 0.0
    %570 = vmatpush1.msra.mxu0 %v541
    %571 = vmatprep.subr.mxu0 0.0
    %572 = vmatpush1.msra.mxu0 %v542
    %573 = vmatprep.subr.mxu0 0.0
    %574 = vmatpush1.msra.mxu0 %v543
    %575 = vmatprep.subr.mxu0 0.0
    %576 = vmatpush1.msra.mxu0 %v544
    %577 = vmatprep.subr.mxu0 0.0
    %578 = vmatpush1.msra.mxu0 %v545
    %579 = vmatprep.subr.mxu0 0.0
    %580 = vmatpush1.msra.mxu0 %v546
    %581 = vmatprep.subr.mxu0 0.0
    %582 = vmatpush1.msra.mxu0 %v547
    %583 = vmatprep.subr.mxu0 0.0
    %584 = vmatpush1.msra.mxu0 %v548
    %585 = vmatprep.subr.mxu0 0.0
    %586 = vmatpush1.msra.mxu0 %v549
    %587 = vmatprep.subr.mxu0 0.0
    %588 = vmatpush1.msra.mxu0 %v550
    %589 = vmatprep.subr.mxu0 0.0
    %590 = vmatpush1.msra.mxu0 %v551
    %591 = vmatprep.subr.mxu0 0.0
    %592 = vmatpush1.msra.mxu0 0.0
    %593 = vmatprep.subr.mxu0 0.0
    %594 = vmatpush1.msra.mxu0 0.0
    %595 = vmatprep.subr.mxu0 0.0
    %596 = vmatpush1.msra.mxu0 0.0
    %597 = vmatprep.subr.mxu0 0.0
    %598 = vmatpush1.msra.mxu0 0.0
    %599 = vmatprep.subr.mxu0 0.0
    %600 = vmatpush1.msra.mxu0 0.0
    %601 = vmatprep.subr.mxu0 0.0
    %602 = vmatpush1.msra.mxu0 0.0
    %603 = vmatprep.subr.mxu0 0.0
    %604 = vmatpush1.msra.mxu0 0.0
    %605 = vmatprep.subr.mxu0 0.0
    %606 = vmatpush1.msra.mxu0 0.0
    %607 = vmatprep.subr.mxu0 0.0
    %608 = vmatpush1.msra.mxu0 0.0
    %609 = vmatprep.subr.mxu0 0.0
    %610 = vmatpush1.msra.mxu0 0.0
    %611 = vmatprep.subr.mxu0 0.0
    %612 = vmatpush1.msra.mxu0 0.0
    %613 = vmatprep.subr.mxu0 0.0
    %614 = vmatpush1.msra.mxu0 0.0
    %615 = vmatprep.subr.mxu0 0.0
    %616 = vmatpush1.msra.mxu0 0.0
    %617 = vmatprep.subr.mxu0 0.0
    %618 = vmatpush1.msra.mxu0 0.0
    %619 = vmatprep.subr.mxu0 0.0
    %620 = vmatpush1.msra.mxu0 0.0
    %621 = vmatprep.subr.mxu0 0.0
    %622 = vmatpush1.msra.mxu0 0.0
    %623 = vmatprep.mubr.f32.mxu0 0.0
    %624 = vmatmul.mubr.f32.gmra.mrb[0].mxu0 %v534
    %v625 = vpop.f32.mrb[0].mxu0
    %v626 = vadd.f32 %v557, %v625
    %v627 = vpop.f32.mrb[0].mxu0
    %628 = vdwg.mxu0
    %629 = vst [vmem:[#allocation18] sm:$0xff] %v626
    %v630 = vmax.f32 %v626, 0.0
    %631 = vst [vmem:[#allocation20] sm:$0xff] %v630
    %v632 = vld [vmem:[#allocation10] sm:$0xff]
    %v633 = vld [vmem:[#allocation10 + $0x8] sm:$0xff]
    %v634 = vld [vmem:[#allocation10 + $0x10] sm:$0xff]
    %v635 = vld [vmem:[#allocation10 + $0x18] sm:$0xff]
    %v636 = vld [vmem:[#allocation10 + $0x20] sm:$0xff]
    %v637 = vld [vmem:[#allocation10 + $0x28] sm:$0xff]
    %v638 = vld [vmem:[#allocation10 + $0x30] sm:$0xff]
    %v639 = vld [vmem:[#allocation10 + $0x38] sm:$0xff]
    %v640 = vld [vmem:[#allocation10 + $0x40] sm:$0xff]
    %v641 = vld [vmem:[#allocation10 + $0x48] sm:$0xff]
    %v642 = vld [vmem:[#allocation10 + $0x50] sm:$0xff]
    %v643 = vld [vmem:[#allocation10 + $0x58] sm:$0xff]
    %v644 = vld [vmem:[#allocation10 + $0x60] sm:$0xff]
    %v645 = vld [vmem:[#allocation10 + $0x68] sm:$0xff]
    %v646 = vld [vmem:[#allocation10 + $0x70] sm:$0xff]
    %v647 = vld [vmem:[#allocation10 + $0x78] sm:$0xff]
    %v648 = vld [vmem:[%s8] sm:$0x1]
    %v650 = vlaneseq
    %v651 = vshrl.u32 %v650, 7
    %v652 = vsub.s32 0, %v651
    %v653 = vrot.slane %v648, %v652
    %655 = vmatprep.subr.mxu0 0.0
    %656 = vmatpush1.msra.mxu0 %v632
    %657 = vmatprep.subr.mxu0 0.0
    %658 = vmatpush1.msra.mxu0 %v633
    %659 = vmatprep.subr.mxu0 0.0
    %660 = vmatpush1.msra.mxu0 %v634
    %661 = vmatprep.subr.mxu0 0.0
    %662 = vmatpush1.msra.mxu0 %v635
    %663 = vmatprep.subr.mxu0 0.0
    %664 = vmatpush1.msra.mxu0 %v636
    %665 = vmatprep.subr.mxu0 0.0
    %666 = vmatpush1.msra.mxu0 %v637
    %667 = vmatprep.subr.mxu0 0.0
    %668 = vmatpush1.msra.mxu0 %v638
    %669 = vmatprep.subr.mxu0 0.0
    %670 = vmatpush1.msra.mxu0 %v639
    %671 = vmatprep.subr.mxu0 0.0
    %672 = vmatpush1.msra.mxu0 %v640
    %673 = vmatprep.subr.mxu0 0.0
    %674 = vmatpush1.msra.mxu0 %v641
    %675 = vmatprep.subr.mxu0 0.0
    %676 = vmatpush1.msra.mxu0 %v642
    %677 = vmatprep.subr.mxu0 0.0
    %678 = vmatpush1.msra.mxu0 %v643
    %679 = vmatprep.subr.mxu0 0.0
    %680 = vmatpush1.msra.mxu0 %v644
    %681 = vmatprep.subr.mxu0 0.0
    %682 = vmatpush1.msra.mxu0 %v645
    %683 = vmatprep.subr.mxu0 0.0
    %684 = vmatpush1.msra.mxu0 %v646
    %685 = vmatprep.subr.mxu0 0.0
    %686 = vmatpush1.msra.mxu0 %v647
    %687 = vmatprep.subr.mxu0 0.0
    %688 = vmatpush1.msra.mxu0 0.0
    %689 = vmatprep.subr.mxu0 0.0
    %690 = vmatpush1.msra.mxu0 0.0
    %691 = vmatprep.subr.mxu0 0.0
    %692 = vmatpush1.msra.mxu0 0.0
    %693 = vmatprep.subr.mxu0 0.0
    %694 = vmatpush1.msra.mxu0 0.0
    %695 = vmatprep.subr.mxu0 0.0
    %696 = vmatpush1.msra.mxu0 0.0
    %697 = vmatprep.subr.mxu0 0.0
    %698 = vmatpush1.msra.mxu0 0.0
    %699 = vmatprep.subr.mxu0 0.0
    %700 = vmatpush1.msra.mxu0 0.0
    %701 = vmatprep.subr.mxu0 0.0
    %702 = vmatpush1.msra.mxu0 0.0
    %703 = vmatprep.subr.mxu0 0.0
    %704 = vmatpush1.msra.mxu0 0.0
    %705 = vmatprep.subr.mxu0 0.0
    %706 = vmatpush1.msra.mxu0 0.0
    %707 = vmatprep.subr.mxu0 0.0
    %708 = vmatpush1.msra.mxu0 0.0
    %709 = vmatprep.subr.mxu0 0.0
    %710 = vmatpush1.msra.mxu0 0.0
    %711 = vmatprep.subr.mxu0 0.0
    %712 = vmatpush1.msra.mxu0 0.0
    %713 = vmatprep.subr.mxu0 0.0
    %714 = vmatpush1.msra.mxu0 0.0
    %715 = vmatprep.subr.mxu0 0.0
    %716 = vmatpush1.msra.mxu0 0.0
    %717 = vmatprep.subr.mxu0 0.0
    %718 = vmatpush1.msra.mxu0 0.0
    %719 = vmatprep.mubr.f32.mxu0 0.0
    %720 = vmatmul.mubr.f32.gmra.mrb[0].mxu0 %v630
    %v721 = vpop.f32.mrb[0].mxu0
    %v722 = vadd.f32 %v653, %v721
    %v723 = vpop.f32.mrb[0].mxu0
    %724 = vdwg.mxu0
    %725 = vst [vmem:[#allocation11] sm:$0xff] %v722
    // Predicated region
    $region58: #{tpu_custom_call.1} parent=1 // pred_check
      _
    $region59: #{tpu_custom_call.1} parent=1 // pred_check_branch
      %727 = sbr.rel (0) target = $region61
    $region60: #{tpu_custom_call.1} parent=1 // pred_region
      %s729 = ssub.s32 128, 128
      %730 = vsyncadd [#allocation4], %s729
      %s732 = sshll.u32 [#allocation11], 4
      %s733 = int_to_ptr.vmem [resolvable:$true] %s732
      %735 = dma.vmem_to_hbm [thread:$0]  %s733, 128, %s9, [#allocation4]
    $region61: #{tpu_custom_call.1} parent=1 // pred_fallthru
      _
    // Predicated region
    $region62: #{tpu_custom_call.1} parent=1 // pred_check
      _
    $region63: #{tpu_custom_call.1} parent=1 // pred_check_branch
      %737 = sbr.rel (0) target = $region65
    $region64: #{tpu_custom_call.1} parent=1 // pred_region
      %s739 = ssub.s32 512, 512
      %740 = vsyncadd [#allocation13], %s739
      %s742 = sshll.u32 [#allocation12], 4
      %s743 = int_to_ptr.vmem [resolvable:$true] %s742
      %745 = dma.vmem_to_hbm [thread:$0]  %s743, 512, %s10, [#allocation13]
    $region65: #{tpu_custom_call.1} parent=1 // pred_fallthru
      _
    // Predicated region
    $region66: #{tpu_custom_call.1} parent=1 // pred_check
      _
    $region67: #{tpu_custom_call.1} parent=1 // pred_check_branch
      %747 = sbr.rel (0) target = $region69
    $region68: #{tpu_custom_call.1} parent=1 // pred_region
      %s749 = ssub.s32 512, 512
      %750 = vsyncadd [#allocation13], %s749
      %s752 = sshll.u32 [#allocation14], 4
      %s753 = int_to_ptr.vmem [resolvable:$true] %s752
      %755 = dma.vmem_to_hbm [thread:$0]  %s753, 512, %s11, [#allocation13]
    $region69: #{tpu_custom_call.1} parent=1 // pred_fallthru
      _
    // Predicated region
    $region70: #{tpu_custom_call.1} parent=1 // pred_check
      _
    $region71: #{tpu_custom_call.1} parent=1 // pred_check_branch
      %757 = sbr.rel (0) target = $region73
    $region72: #{tpu_custom_call.1} parent=1 // pred_region
      %s759 = ssub.s32 128, 128
      %760 = vsyncadd [#allocation16], %s759
      %s762 = sshll.u32 [#allocation15], 4
      %s763 = int_to_ptr.vmem [resolvable:$true] %s762
      %765 = dma.vmem_to_hbm [thread:$0]  %s763, 128, %s12, [#allocation16]
    $region73: #{tpu_custom_call.1} parent=1 // pred_fallthru
      _
    // Predicated region
    $region74: #{tpu_custom_call.1} parent=1 // pred_check
      _
    $region75: #{tpu_custom_call.1} parent=1 // pred_check_branch
      %767 = sbr.rel (0) target = $region77
    $region76: #{tpu_custom_call.1} parent=1 // pred_region
      %s769 = ssub.s32 128, 128
      %770 = vsyncadd [#allocation16], %s769
      %s772 = sshll.u32 [#allocation17], 4
      %s773 = int_to_ptr.vmem [resolvable:$true] %s772
      %775 = dma.vmem_to_hbm [thread:$0]  %s773, 128, %s13, [#allocation16]
    $region77: #{tpu_custom_call.1} parent=1 // pred_fallthru
      _
    // Predicated region
    $region78: #{tpu_custom_call.1} parent=1 // pred_check
      _
    $region79: #{tpu_custom_call.1} parent=1 // pred_check_branch
      %777 = sbr.rel (0) target = $region81
    $region80: #{tpu_custom_call.1} parent=1 // pred_region
      %s779 = ssub.s32 128, 128
      %780 = vsyncadd [#allocation19], %s779
      %s782 = sshll.u32 [#allocation18], 4
      %s783 = int_to_ptr.vmem [resolvable:$true] %s782
      %785 = dma.vmem_to_hbm [thread:$0]  %s783, 128, %s14, [#allocation19]
    $region81: #{tpu_custom_call.1} parent=1 // pred_fallthru
      _
    // Predicated region
    $region82: #{tpu_custom_call.1} parent=1 // pred_check
      _
    $region83: #{tpu_custom_call.1} parent=1 // pred_check_branch
      %787 = sbr.rel (0) target = $region85
    $region84: #{tpu_custom_call.1} parent=1 // pred_region
      %s789 = ssub.s32 128, 128
      %790 = vsyncadd [#allocation19], %s789
      %s792 = sshll.u32 [#allocation20], 4
      %s793 = int_to_ptr.vmem [resolvable:$true] %s792
      %795 = dma.vmem_to_hbm [thread:$0]  %s793, 128, %s15, [#allocation19]
    $region85: #{tpu_custom_call.1} parent=1 // pred_fallthru
      _
    // Predicated region
    $region86: #{tpu_custom_call.1} parent=1 // pred_check
      _
    $region87: #{tpu_custom_call.1} parent=1 // pred_check_branch
      %797 = sbr.rel (0) target = $region89
    $region88: #{tpu_custom_call.1} parent=1 // pred_region
      %798 = dma.done [#allocation4], 128
    $region89: #{tpu_custom_call.1} parent=1 // pred_fallthru
      _
    // Predicated region
    $region90: #{tpu_custom_call.1} parent=1 // pred_check
      _
    $region91: #{tpu_custom_call.1} parent=1 // pred_check_branch
      %800 = sbr.rel (0) target = $region93
    $region92: #{tpu_custom_call.1} parent=1 // pred_region
      %801 = dma.done [#allocation13], 512
    $region93: #{tpu_custom_call.1} parent=1 // pred_fallthru
      _
    // Predicated region
    $region94: #{tpu_custom_call.1} parent=1 // pred_check
      _
    $region95: #{tpu_custom_call.1} parent=1 // pred_check_branch
      %803 = sbr.rel (0) target = $region97
    $region96: #{tpu_custom_call.1} parent=1 // pred_region
      %804 = dma.done [#allocation13], 512
    $region97: #{tpu_custom_call.1} parent=1 // pred_fallthru
      _
    // Predicated region
    $region98: #{tpu_custom_call.1} parent=1 // pred_check
      _
    $region99: #{tpu_custom_call.1} parent=1 // pred_check_branch
      %806 = sbr.rel (0) target = $region101
    $region100: #{tpu_custom_call.1} parent=1 // pred_region
      %807 = dma.done [#allocation16], 128
    $region101: #{tpu_custom_call.1} parent=1 // pred_fallthru
      _
    // Predicated region
    $region102: #{tpu_custom_call.1} parent=1 // pred_check
      _
    $region103: #{tpu_custom_call.1} parent=1 // pred_check_branch
      %809 = sbr.rel (0) target = $region105
    $region104: #{tpu_custom_call.1} parent=1 // pred_region
      %810 = dma.done [#allocation16], 128
    $region105: #{tpu_custom_call.1} parent=1 // pred_fallthru
      _
    // Predicated region
    $region106: #{tpu_custom_call.1} parent=1 // pred_check
      _
    $region107: #{tpu_custom_call.1} parent=1 // pred_check_branch
      %812 = sbr.rel (0) target = $region109
    $region108: #{tpu_custom_call.1} parent=1 // pred_region
      %813 = dma.done [#allocation19], 128
    $region109: #{tpu_custom_call.1} parent=1 // pred_fallthru
      _
    // Predicated region
    $region110: #{tpu_custom_call.1} parent=1 // pred_check
      _
    $region111: #{tpu_custom_call.1} parent=1 // pred_check_branch
      %815 = sbr.rel (0) target = $region113
    $region112: #{tpu_custom_call.1} parent=1 // pred_region
      %816 = dma.done [#allocation19], 128
    $region113: #{tpu_custom_call.1} parent=1 // pred_fallthru
      _
    %817 = vsyncpa [#allocation3], 1
    %818 = vsyncpa [#allocation6], 1
    %819 = vsyncpa [#allocation9], 1
    %820 = vsyncpa [#allocation4], 1
    %821 = vsyncpa [#allocation13], 1
    %822 = vsyncpa [#allocation16], 1
    %823 = vsyncpa [#allocation19], 1

</llo_original>
